<compile_context>
chip_gen: v5e
topology: v5e:2x2
jax: 0.10.0
libtpu: 0.0.40
codegen_flags: <defaults>
</compile_context>

<pallas_src>
from functools import partial

import jax
import jax.numpy as jnp
from jax.experimental import pallas as pl
from jax.experimental.pallas import tpu as pltpu


def _ce_label_smooth_kernel(x_ref, t_ref, o_ref, *, epsilon, num_classes,
                            batch, tile_n):
    # x_ref: (TILE_N, C) logits block in VMEM
    # t_ref: (TILE_N, 1) int32 targets block in VMEM
    # o_ref: (1, 1) f32 per-tile partial sum in SMEM
    x = x_ref[...].astype(jnp.float32)                       # (T, C)
    t = t_ref[...]                                           # (T, 1) int32

    # Numerically stable pieces of log_softmax without materializing it.
    m = jnp.max(x, axis=1, keepdims=True)                    # (T, 1)
    shifted = x - m                                          # (T, C)
    lse = jnp.log(jnp.sum(jnp.exp(shifted), axis=1, keepdims=True))  # (T, 1)
    row_sum = jnp.sum(shifted, axis=1, keepdims=True)        # (T, 1)

    # Target logit via masked row reduction (no one-hot tensor).
    col = jax.lax.broadcasted_iota(jnp.int32, x.shape, 1)    # (T, C)
    tgt_logit = jnp.sum(jnp.where(col == t, shifted, 0.0),
                        axis=1, keepdims=True)               # (T, 1)

    # per-row loss = -(1-eps)*log_probs[t] - (eps/C)*sum(log_probs)
    inv_c = 1.0 / float(num_classes)
    row_loss = ((1.0 - epsilon) * (lse - tgt_logit)
                + (epsilon * inv_c) * (float(num_classes) * lse - row_sum))

    # Mask out padded rows (global row index >= batch).
    row_idx = (pl.program_id(0) * tile_n
               + jax.lax.broadcasted_iota(jnp.int32, (tile_n, 1), 0))
    row_loss = jnp.where(row_idx < batch, row_loss, 0.0)

    # Per-tile partial sum; the /batch happens once in the wrapper.
    o_ref[0, 0] = jnp.sum(row_loss)


def cross_entropy_label_smooth(inputs, targets, *, num_classes, epsilon,
                               tile_n=128):
    """inputs: (N, C) float logits; targets: (N,) int class ids -> scalar loss."""
    N, C = inputs.shape
    assert C == num_classes

    # Pick a batch tile: multiple of 8, no bigger than needed for small N.
    tile_n = int(tile_n)
    if N <= tile_n:
        tile_n = max(8, -(-N // 8) * 8)          # next multiple of 8 >= N
    n_pad = -(-N // tile_n) * tile_n
    num_tiles = n_pad // tile_n

    if n_pad != N:
        pad = n_pad - N
        inputs = jnp.pad(inputs, ((0, pad), (0, 0)))
        targets = jnp.pad(targets, ((0, pad),))

    t2 = targets.reshape(n_pad, 1).astype(jnp.int32)

    partials = pl.pallas_call(
        partial(
            _ce_label_smooth_kernel,
            epsilon=float(epsilon),
            num_classes=int(num_classes),
            batch=int(N),
            tile_n=tile_n,
        ),
        out_shape=jax.ShapeDtypeStruct((num_tiles, 1), jnp.float32),
        grid=(num_tiles,),
        in_specs=[
            pl.BlockSpec((tile_n, C), lambda i: (i, 0)),
            pl.BlockSpec((tile_n, 1), lambda i: (i, 0)),
        ],
        out_specs=pl.BlockSpec((1, 1), lambda i: (i, 0),
                               memory_space=pltpu.MemorySpace.SMEM),
        compiler_params=pltpu.CompilerParams(
            dimension_semantics=("parallel",)),
    )(inputs, t2)

    return jnp.sum(partials) / jnp.float32(N)


def _reference(inputs, targets, num_classes, epsilon):
    log_probs = jax.nn.log_softmax(inputs.astype(jnp.float32), axis=1)
    onehot = jax.nn.one_hot(targets, num_classes, dtype=jnp.float32)
    tgt = (1.0 - epsilon) * onehot + epsilon / num_classes
    return jnp.sum(jnp.mean(-tgt * log_probs, axis=0))


if __name__ == "__main__":
    num_classes = 32
    epsilon = 0.1
    batch = 10   # deliberately not a multiple of 8 to exercise the pad/mask path

    key = jax.random.PRNGKey(0)
    k_x, k_t = jax.random.split(key)
    inputs = jax.random.normal(k_x, (batch, num_classes), dtype=jnp.float32)
    targets = jax.random.randint(k_t, (batch,), 0, num_classes, dtype=jnp.int32)

    loss = cross_entropy_label_smooth(
        inputs, targets, num_classes=num_classes, epsilon=epsilon
    )
    loss = jax.block_until_ready(loss)

    ref = _reference(inputs, targets, num_classes, epsilon)
    assert jnp.allclose(loss, ref, atol=1e-5, rtol=1e-5), (loss, ref)

    print("KERNEL_OK")
</pallas_src>

<mosaic_0001>
module attributes {stable_mosaic.version = 11 : i64} {
  func.func @_ce_label_smooth_kernel(%arg0: i32, %arg1: memref<16x32xf32, #tpu.memory_space<vmem>>, %arg2: memref<16x1xi32, #tpu.memory_space<vmem>>, %arg3: memref<1x1xf32, #tpu.memory_space<smem>>) attributes {dimension_semantics = [#tpu.dimension_semantics<parallel>], iteration_bounds = array<i64: 1>, scalar_prefetch = 0 : i64, scratch_operands = 0 : i64, tpu.core_type = #tpu.core_type<tc>, window_params = [{transform_indices = @transform_0, window_bounds = array<i64: 16, 32>}, {transform_indices = @transform_1, window_bounds = array<i64: 16, 1>}, {transform_indices = @transform_2, window_bounds = array<i64: 1, 1>}]} {
    %c0 = arith.constant 0 : index
    %c0_0 = arith.constant 0 : index
    %0 = vector.load %arg1[%c0, %c0_0] : memref<16x32xf32, #tpu.memory_space<vmem>>, vector<16x32xf32>
    %c0_1 = arith.constant 0 : index
    %c0_2 = arith.constant 0 : index
    %1 = vector.load %arg2[%c0_1, %c0_2] : memref<16x1xi32, #tpu.memory_space<vmem>>, vector<16x1xi32>
    %cst = arith.constant dense<0xFF800000> : vector<16xf32>
    %2 = vector.multi_reduction <maximumf>, %0, %cst [1] : vector<16x32xf32> to vector<16xf32>
    %3 = vector.shape_cast %2 : vector<16xf32> to vector<16x1xf32>
    %4 = vector.broadcast %3 : vector<16x1xf32> to vector<16x32xf32>
    %5 = arith.subf %0, %4 : vector<16x32xf32>
    %6 = math.exp %5 : vector<16x32xf32>
    %cst_3 = arith.constant dense<0.000000e+00> : vector<16xf32>
    %7 = vector.multi_reduction <add>, %6, %cst_3 [1] : vector<16x32xf32> to vector<16xf32>
    %8 = vector.shape_cast %7 : vector<16xf32> to vector<16x1xf32>
    %9 = math.log %8 : vector<16x1xf32>
    %cst_4 = arith.constant dense<0.000000e+00> : vector<16xf32>
    %10 = vector.multi_reduction <add>, %5, %cst_4 [1] : vector<16x32xf32> to vector<16xf32>
    %11 = vector.shape_cast %10 : vector<16xf32> to vector<16x1xf32>
    %12 = tpu.iota {dimensions = array<i32: 1>} : vector<16x32xi32>
    %13 = vector.broadcast %1 : vector<16x1xi32> to vector<16x32xi32>
    %14 = arith.cmpi eq, %12, %13 : vector<16x32xi32>
    %cst_5 = arith.constant 0.000000e+00 : f32
    %15 = vector.broadcast %cst_5 : f32 to vector<16x32xf32>
    %16 = arith.select %14, %5, %15 : vector<16x32xi1>, vector<16x32xf32>
    %cst_6 = arith.constant dense<0.000000e+00> : vector<16xf32>
    %17 = vector.multi_reduction <add>, %16, %cst_6 [1] : vector<16x32xf32> to vector<16xf32>
    %18 = vector.shape_cast %17 : vector<16xf32> to vector<16x1xf32>
    %19 = arith.subf %9, %18 : vector<16x1xf32>
    %cst_7 = arith.constant 0.899999976 : f32
    %20 = vector.broadcast %cst_7 : f32 to vector<16x1xf32>
    %21 = arith.mulf %20, %19 : vector<16x1xf32>
    %cst_8 = arith.constant 3.200000e+01 : f32
    %22 = vector.broadcast %cst_8 : f32 to vector<16x1xf32>
    %23 = arith.mulf %22, %9 : vector<16x1xf32>
    %24 = arith.subf %23, %11 : vector<16x1xf32>
    %cst_9 = arith.constant 3.125000e-03 : f32
    %25 = vector.broadcast %cst_9 : f32 to vector<16x1xf32>
    %26 = arith.mulf %25, %24 : vector<16x1xf32>
    %27 = arith.addf %21, %26 : vector<16x1xf32>
    %c16_i32 = arith.constant 16 : i32
    %28 = arith.muli %arg0, %c16_i32 : i32
    %29 = tpu.iota {dimensions = array<i32: 0>} : vector<16x1xi32>
    %30 = vector.broadcast %28 : i32 to vector<16x1xi32>
    %31 = arith.addi %30, %29 : vector<16x1xi32>
    %c10_i32 = arith.constant 10 : i32
    %32 = vector.broadcast %c10_i32 : i32 to vector<16x1xi32>
    %33 = arith.cmpi slt, %31, %32 : vector<16x1xi32>
    %cst_10 = arith.constant 0.000000e+00 : f32
    %34 = vector.broadcast %cst_10 : f32 to vector<16x1xf32>
    %35 = arith.select %33, %27, %34 : vector<16x1xi1>, vector<16x1xf32>
    %36 = vector.shape_cast %35 : vector<16x1xf32> to vector<1x16x1xf32>
    %cst_11 = arith.constant dense<0.000000e+00> : vector<1xf32>
    %37 = vector.multi_reduction <add>, %36, %cst_11 [1, 2] : vector<1x16x1xf32> to vector<1xf32>
    %38 = vector.shape_cast %37 : vector<1xf32> to vector<1x1x1xf32>
    %39 = vector.extract %38[0, 0, 0] : f32 from vector<1x1x1xf32>
    %c0_12 = arith.constant 0 : index
    %c0_13 = arith.constant 0 : index
    %40 = memref.load %arg3[%c0_12, %c0_13] : memref<1x1xf32, #tpu.memory_space<smem>>
    memref.store %39, %arg3[%c0_12, %c0_13] : memref<1x1xf32, #tpu.memory_space<smem>>
    return
  }
  func.func @transform_0(%arg0: i32) -> (i32, i32) {
    %c0_i32 = arith.constant 0 : i32
    %c0_i32_0 = arith.constant 0 : i32
    return %arg0, %c0_i32 : i32, i32
  }
  func.func @transform_1(%arg0: i32) -> (i32, i32) {
    %c0_i32 = arith.constant 0 : i32
    %c0_i32_0 = arith.constant 0 : i32
    return %arg0, %c0_i32 : i32, i32
  }
  func.func @transform_2(%arg0: i32) -> (i32, i32) {
    %c0_i32 = arith.constant 0 : i32
    %c0_i32_0 = arith.constant 0 : i32
    return %arg0, %c0_i32 : i32, i32
  }
}

</mosaic_0001>

<llo_original>
// kernel: tpu_custom_call.1
$region0: #{tpu_custom_call.1}
  #allocation0 [shape = 'u32[]', space=smem, size = 0x4, offset = 0x4, fixed_abs, tag = 'smem constant byte address 0x4 - core index']
  #allocation1 [shape = 'u32[72,128]{1,0:T(1,128)}', space=vmem, size = 0x9000, scoped, tag = 'internal scratch']
  %s0 = inlined_call_operand.vmem [shape: f32[16,32], index: 0, kind: input, shape index: {}]
  %s1 = inlined_call_operand.vmem [shape: s32[16,1], index: 1, kind: input, shape index: {}]
  %s2 = inlined_call_operand.hbm [shape: f32[1,1], index: 2, kind: output, shape index: {}]
  %s3 = sld [smem:[#allocation0]]
  $region18: #{tpu_custom_call.1} parent=0
    _
  %s5 = ssub.s32 1, %s3
  %s6 = scalar_select 0, %s5, %s3
  $region1: #{tpu_custom_call.1} parent=0
    #allocation2 [shape = 'u8[512]{0}', space=smem, size = 0x200, scoped, tag = 'output window, operand 0, single buffered']
    #allocation3 [shape = 's32[1]{0}', space=sflag, size = 0x4, scoped, tag = 'scoped memory for tpu_custom_call.1']
    %7 = vsyncpa [#allocation3], 0
    // Predicated region
    $region2: #{tpu_custom_call.1} parent=1 // pred_check
      _
    $region3: #{tpu_custom_call.1} parent=1 // pred_check_branch
      %9 = sbr.rel (0) target = $region5
    $region4: #{tpu_custom_call.1} parent=1 // pred_region
      _
    $region5: #{tpu_custom_call.1} parent=1 // pred_fallthru
      _
    // Predicated region
    $region6: #{tpu_custom_call.1} parent=1 // pred_check
      _
    $region7: #{tpu_custom_call.1} parent=1 // pred_check_branch
      %11 = sbr.rel (0) target = $region9
    $region8: #{tpu_custom_call.1} parent=1 // pred_region
      _
    $region9: #{tpu_custom_call.1} parent=1 // pred_fallthru
      _
    %v12 = vld [vmem:[%s0] sm:$0xff]
    %v13 = vld [vmem:[%s0 + $0x8] sm:$0xff]
    %v14 = vld [vmem:[%s1] sm:$0xff]
    %v15 = vld [vmem:[%s1 + $0x8] sm:$0xff]
    %vm16 = vcmask 261120
    %v17 = vsel %vm16, %v12, -inf
    %18 = vmax.xlane.f32.xlu0 %v17
    %v19 = vpop.xlane.xlu0 %18
    %v20 = vsel %vm16, %v13, -inf
    %21 = vmax.xlane.f32.xlu0 %v20
    %v22 = vpop.xlane.xlu0 %21
    %v23 = vsub.f32 %v12, %v19
    %v24 = vsub.f32 %v13, %v22
    %v25 = vmul.f32 %v23, 1.442695
    %v26 = vpow.pop %v25
    %v27 = vmul.f32 %v24, 1.442695
    %v28 = vpow.pop %v27
    %v29 = vsel %vm16, %v26, 0.0
    %30 = vadd.xlane.f32.xlu0 %v29
    %v31 = vpop.xlane.xlu0 %30
    %v32 = vsel %vm16, %v28, 0.0
    %33 = vadd.xlane.f32.xlu0 %v32
    %v34 = vpop.xlane.xlu0 %33
    %v35 = vlog2.pop %v31
    %v36 = vmul.f32 %v35, 0.6931472
    %v37 = vlog2.pop %v34
    %v38 = vmul.f32 %v37, 0.6931472
    %v39 = vsel %vm16, %v23, 0.0
    %40 = vadd.xlane.f32.xlu0 %v39
    %v41 = vpop.xlane.xlu0 %40
    %v42 = vsel %vm16, %v24, 0.0
    %43 = vadd.xlane.f32.xlu0 %v42
    %v44 = vpop.xlane.xlu0 %43
    %v45 = vlaneseq
    %v46 = vand.u32 %v45, 127
    %47 = vset.pattern.permute.xlu0 0
    %48 = vperm.xlu0 %47, %v14
    %v49 = vpop.permute.xlu0 %48
    %50 = vset.pattern.permute.xlu0 0
    %51 = vperm.xlu0 %50, %v15
    %v52 = vpop.permute.xlu0 %51
    %vm53 = vcmp.eq.s32.totalorder %v46, %v49
    %vm54 = vcmp.eq.s32.totalorder %v46, %v52
    %v55 = vsel %vm53, %v23, 0.0
    %v56 = vsel %vm54, %v24, 0.0
    %v57 = vsel %vm16, %v55, 0.0
    %58 = vadd.xlane.f32.xlu0 %v57
    %v59 = vpop.xlane.xlu0 %58
    %v60 = vsel %vm16, %v56, 0.0
    %61 = vadd.xlane.f32.xlu0 %v60
    %v62 = vpop.xlane.xlu0 %61
    %v63 = vsub.f32 %v36, %v59
    %v64 = vsub.f32 %v38, %v62
    %v65 = vmul.f32 %v63, 0.9
    %v66 = vmul.f32 %v64, 0.9
    %v67 = vmul.f32 %v36, 32.0
    %v68 = vmul.f32 %v38, 32.0
    %v69 = vsub.f32 %v67, %v41
    %v70 = vsub.f32 %v68, %v44
    %v71 = vmul.f32 %v69, 0.003125
    %v72 = vmul.f32 %v70, 0.003125
    %v73 = vadd.f32 %v65, %v71
    %v74 = vadd.f32 %v66, %v72
    %s75 = smul.u32 0, 16
    %v76 = vlaneseq
    %v77 = vshrl.u32 %v76, 7
    %v78 = vadd.s32 %v77, 8
    %v79 = vstv %s75
    %v80 = vadd.s32 %v79, %v77
    %v81 = vadd.s32 %v79, %v78
    %vm82 = vcmp.lt.s32.totalorder %v80, 10
    %vm83 = vcmp.lt.s32.totalorder %v81, 10
    %v84 = vsel %vm82, %v73, 0.0
    %v85 = vsel %vm83, %v74, 0.0
    %vm86 = vcmask 7168
    %v87 = vsel %vm86, %v84, 0.0
    %v88 = vsel %vm86, %v85, 0.0
    %v89 = vadd.f32 %v87, %v88
    %90 = vadd.xlane.f32.xlu0 %v89
    %v91 = vpop.xlane.xlu0 %90
    %v92 = vrot.slane %v91, 4
    %v93 = vadd.f32 %v91, %v92
    %v94 = vrot.slane %v93, 2
    %v95 = vadd.f32 %v93, %v94
    %v96 = vrot.slane %v95, 1
    %v97 = vadd.f32 %v95, %v96
    %s98 = vtos %v97
    %s99 = scalar_lea.smem [#allocation2], 0
    %100 = sst [smem:[%s99]] %s98
    // Predicated region
    $region10: #{tpu_custom_call.1} parent=1 // pred_check
      _
    $region11: #{tpu_custom_call.1} parent=1 // pred_check_branch
      %102 = sbr.rel (0) target = $region13
    $region12: #{tpu_custom_call.1} parent=1 // pred_region
      %104 = vsyncadd [#allocation3], 0
      %s106 = sshll.u32 %s2, 4
      %s107 = int_to_ptr.hbm [resolvable:$true] %s106
      %109 = dma.smem_to_hbm [#allocation2], 16, %s107, [#allocation3]
    $region13: #{tpu_custom_call.1} parent=1 // pred_fallthru
      _
    // Predicated region
    $region14: #{tpu_custom_call.1} parent=1 // pred_check
      _
    $region15: #{tpu_custom_call.1} parent=1 // pred_check_branch
      %111 = sbr.rel (0) target = $region17
    $region16: #{tpu_custom_call.1} parent=1 // pred_region
      %113 = dma.done [#allocation3], 16
    $region17: #{tpu_custom_call.1} parent=1 // pred_fallthru
      _
    %114 = sfence
    %115 = vsyncpa [#allocation3], 1

</llo_original>
